<compile_context>
chip_gen: v7x
topology: tpu7x:2x2x1
jax: 0.10.0
libtpu: 0.0.40
codegen_flags: <defaults>
</compile_context>

<pallas_src>
import functools
import math

import jax
import jax.numpy as jnp
from jax import lax
from jax.experimental import pallas as pl
from jax.experimental.pallas import tpu as pltpu

_LANE = 128        # TPU vreg lane width
_SUB_LANES = 512   # live compute window (lanes) inside one grid step


def _round_up(a, m):
    return ((a + m - 1) // m) * m


def _mlp_kernel(x_ref,
                w1_ref, b1_ref, w2_ref, b2_ref, w3_ref, b3_ref,
                w4_ref, b4_ref, w5_ref, b5_ref,
                out_ref, *, sub_bt, compute_dtype):
    """Fused 5-layer MLP over one [bt, in] batch tile.

    Params are pre-folded so each layer is  t = tanh(W' @ t_prev + b'), and the
    final 1-wide output applies 0.5*t + 0.5 (the sigmoid un-fold)."""
    bt = x_ref.shape[0]
    num_sub = bt // sub_bt
    hidden = ((w2_ref, b2_ref), (w3_ref, b3_ref),
              (w4_ref, b4_ref), (w5_ref, b5_ref))

    def body(j, carry):
        start = pl.multiple_of(j * sub_bt, sub_bt)
        # [sub_bt, in] slice of the VMEM-resident tile; cast rides the VPU.
        xs = x_ref[pl.ds(start, sub_bt), :].astype(compute_dtype)
        # fc1: contract the feature dim of BOTH operands -> [fc1, sub_bt];
        # batch lands on lanes here, no explicit transpose needed.
        z = lax.dot_general(w1_ref[...], xs, (((1,), (1,)), ((), ())),
                            preferred_element_type=jnp.float32)
        t = jnp.tanh(z + b1_ref[...])                  # f32 bias add + EUP tanh
        for w_ref, b_ref in hidden:
            z = jnp.dot(w_ref[...], t.astype(compute_dtype),
                        preferred_element_type=jnp.float32)
            t = jnp.tanh(z + b_ref[...])
        # Undo the sigmoid->tanh fold only on the final [1, sub_bt] tile.
        out_ref[:, pl.ds(start, sub_bt)] = 0.5 * t + 0.5
        return carry

    # Big DMA tile, vreg-sized live compute window.
    lax.fori_loop(0, num_sub, body, 0, unroll=(num_sub <= 8))


def _fold_params(params, compute_dtype):
    """sigmoid(z) = 0.5*tanh(0.5*z) + 0.5.  Carry activations as t = tanh(.)
    and fold every 0.5*z scale and previous layer's 0.5*t + 0.5 affine into
    (W, b).  All scales are exact powers of two, so the bf16 weight cast loses
    nothing extra.  Returns [(W' [out,in] bf16, b' [out,1] f32), ...]."""
    folded = []
    for l, (w, b) in enumerate(params):
        w = w.astype(jnp.float32)
        b = b.astype(jnp.float32).reshape(-1, 1)
        if l == 0:
            w_f, b_f = 0.5 * w, 0.5 * b
        else:
            w_f = 0.25 * w
            b_f = 0.5 * b + 0.25 * jnp.sum(w, axis=1, keepdims=True)
        folded.append((w_f.astype(compute_dtype), b_f))
    return folded


def net_forward(x, params, *, batch_tile=16384, matmul_dtype=jnp.bfloat16):
    """x: [B, input] float32 (natural PyTorch layout, streamed directly).
    params: [(W [out, in], b [out])] in PyTorch nn.Linear layout.
    Returns [B] (the squeeze(-1) of the final [B, 1] sigmoid output)."""
    B, in_dim = x.shape
    assert batch_tile % _LANE == 0

    # Batch tile: big enough to amortize the ~0.35 us per-grid-step overhead...
    bt = max(_LANE, min(batch_tile, _round_up(B, _LANE)))
    num_tiles = pl.cdiv(B, bt)
    # ...but keep >= 4 grid steps when the batch allows, so the parallel 1-D
    # grid can feed both v7x TensorCores (no-op on single-TC v5e/v6e).
    if num_tiles < 4 and B > 4 * _LANE:
        bt = max(_LANE, _round_up(pl.cdiv(B, 4), _LANE))
        num_tiles = pl.cdiv(B, bt)
    padded_B = num_tiles * bt
    # Inner compute window: <=512 lanes so the live [feat, sub_bt] f32 chain
    # stays in registers (gcd keeps it a divisor of bt and a multiple of 128).
    sub_bt = math.gcd(bt, _SUB_LANES)

    folded = _fold_params(params, matmul_dtype)

    flat_args = [x]
    in_specs = [pl.BlockSpec((bt, in_dim), lambda i: (i, 0))]
    for w, b in folded:
        flat_args += [w, b]
        # Constant block index -> the <10 KiB of parameters stay VMEM-resident
        # across all batch tiles (pipeline skips the re-DMA).
        in_specs.append(pl.BlockSpec(w.shape, lambda i: (0, 0)))
        in_specs.append(pl.BlockSpec(b.shape, lambda i: (0, 0)))

    out_dim = folded[-1][0].shape[0]        # == 1

    y2d = pl.pallas_call(
        functools.partial(_mlp_kernel, sub_bt=sub_bt,
                          compute_dtype=matmul_dtype),
        out_shape=jax.ShapeDtypeStruct((out_dim, padded_B), jnp.float32),
        grid=(num_tiles,),
        in_specs=in_specs,
        out_specs=pl.BlockSpec((out_dim, bt), lambda i: (0, i)),
        compiler_params=pltpu.CompilerParams(
            dimension_semantics=("parallel",)),
    )(*flat_args)

    # squeeze(-1): lane-dense [1, padded_B] -> [B]; drop padded batch columns.
    return y2d[0, :B]


def init_params(key, dims):
    """PyTorch nn.Linear default init: U(-1/sqrt(in), 1/sqrt(in)).
    dims = [input, fc1, fc2, fc3, y, out]; W kept in [out, in], b in [out]."""
    params = []
    for i in range(len(dims) - 1):
        fan_in, fan_out = dims[i], dims[i + 1]
        key, kw, kb = jax.random.split(key, 3)
        bound = 1.0 / math.sqrt(fan_in)
        w = jax.random.uniform(kw, (fan_out, fan_in), jnp.float32, -bound, bound)
        b = jax.random.uniform(kb, (fan_out,), jnp.float32, -bound, bound)
        params.append((w, b))
    return params


def _reference(x, params):
    """Pure-JAX f32 reference of the PyTorch forward (for correctness check)."""
    h = x
    for w, b in params:
        h = jax.nn.sigmoid(h @ w.T + b)
    return jnp.squeeze(h, -1)


if __name__ == "__main__":
    # Net(input=32, fc1=32, fc2=32, fc3=16, y=16, out=1)
    dims = [32, 32, 32, 16, 16, 1]
    batch = 8

    key = jax.random.PRNGKey(0)
    key, kx = jax.random.split(key)
    x = jax.random.normal(kx, (batch, dims[0]), jnp.float32)
    params = init_params(key, dims)

    y = jax.jit(net_forward)(x, params)
    y = jax.block_until_ready(y)

    assert y.shape == (batch,), y.shape
    assert bool(jnp.all(jnp.isfinite(y)))
    y_ref = _reference(x, params)
    assert bool(jnp.max(jnp.abs(y - y_ref)) < 5e-2), jnp.max(jnp.abs(y - y_ref))
    print("KERNEL_OK")
</pallas_src>

<mosaic_0001>
module attributes {stable_mosaic.version = 11 : i64} {
  func.func @_mlp_kernel(%arg0: i32, %arg1: memref<128x32xf32, #tpu.memory_space<vmem>>, %arg2: memref<32x32xbf16, #tpu.memory_space<vmem>>, %arg3: memref<32x1xf32, #tpu.memory_space<vmem>>, %arg4: memref<32x32xbf16, #tpu.memory_space<vmem>>, %arg5: memref<32x1xf32, #tpu.memory_space<vmem>>, %arg6: memref<16x32xbf16, #tpu.memory_space<vmem>>, %arg7: memref<16x1xf32, #tpu.memory_space<vmem>>, %arg8: memref<16x16xbf16, #tpu.memory_space<vmem>>, %arg9: memref<16x1xf32, #tpu.memory_space<vmem>>, %arg10: memref<1x16xbf16, #tpu.memory_space<vmem>>, %arg11: memref<1x1xf32, #tpu.memory_space<vmem>>, %arg12: memref<1x128xf32, #tpu.memory_space<vmem>>) attributes {dimension_semantics = [#tpu.dimension_semantics<parallel>], iteration_bounds = array<i64: 1>, scalar_prefetch = 0 : i64, scratch_operands = 0 : i64, tpu.core_type = #tpu.core_type<tc>, window_params = [{transform_indices = @transform_0, window_bounds = array<i64: 128, 32>}, {pipeline_mode = #tpu.pipeline_mode<synchronous>, transform_indices = @transform_1, window_bounds = array<i64: 32, 32>}, {pipeline_mode = #tpu.pipeline_mode<synchronous>, transform_indices = @transform_2, window_bounds = array<i64: 32, 1>}, {pipeline_mode = #tpu.pipeline_mode<synchronous>, transform_indices = @transform_3, window_bounds = array<i64: 32, 32>}, {pipeline_mode = #tpu.pipeline_mode<synchronous>, transform_indices = @transform_4, window_bounds = array<i64: 32, 1>}, {pipeline_mode = #tpu.pipeline_mode<synchronous>, transform_indices = @transform_5, window_bounds = array<i64: 16, 32>}, {pipeline_mode = #tpu.pipeline_mode<synchronous>, transform_indices = @transform_6, window_bounds = array<i64: 16, 1>}, {pipeline_mode = #tpu.pipeline_mode<synchronous>, transform_indices = @transform_7, window_bounds = array<i64: 16, 16>}, {pipeline_mode = #tpu.pipeline_mode<synchronous>, transform_indices = @transform_8, window_bounds = array<i64: 16, 1>}, {pipeline_mode = #tpu.pipeline_mode<synchronous>, transform_indices = @transform_9, window_bounds = array<i64: 1, 16>}, {pipeline_mode = #tpu.pipeline_mode<synchronous>, transform_indices = @transform_10, window_bounds = array<i64: 1, 1>}, {transform_indices = @transform_11, window_bounds = array<i64: 1, 128>}]} {
    %c0_i32 = arith.constant 0 : i32
    %c128_i32 = arith.constant 128 : i32
    %0 = arith.muli %c0_i32, %c128_i32 : i32
    %1 = tpu.assume_multiple %0, 128 : i32
    %2 = arith.index_cast %1 : i32 to index
    %c0 = arith.constant 0 : index
    %3 = vector.load %arg1[%2, %c0] : memref<128x32xf32, #tpu.memory_space<vmem>>, vector<128x32xf32>
    %4 = arith.truncf %3 : vector<128x32xf32> to vector<128x32xbf16>
    %c0_0 = arith.constant 0 : index
    %c0_1 = arith.constant 0 : index
    %5 = vector.load %arg2[%c0_0, %c0_1] : memref<32x32xbf16, #tpu.memory_space<vmem>>, vector<32x32xbf16>
    %cst = arith.constant dense<0.000000e+00> : vector<32x128xf32>
    %6 = tpu.matmul %5, %4, %cst {dimension_numbers = #tpu.dot_dimension_numbers<[1], [1], [0], [0], [0, 0, 1, 0], [], []>} : vector<32x32xbf16>, vector<128x32xbf16>, vector<32x128xf32> -> vector<32x128xf32>
    %c0_2 = arith.constant 0 : index
    %c0_3 = arith.constant 0 : index
    %7 = vector.load %arg3[%c0_2, %c0_3] : memref<32x1xf32, #tpu.memory_space<vmem>>, vector<32x1xf32>
    %8 = vector.broadcast %7 : vector<32x1xf32> to vector<32x128xf32>
    %9 = arith.addf %6, %8 : vector<32x128xf32>
    %10 = math.tanh %9 : vector<32x128xf32>
    %c0_4 = arith.constant 0 : index
    %c0_5 = arith.constant 0 : index
    %11 = vector.load %arg4[%c0_4, %c0_5] : memref<32x32xbf16, #tpu.memory_space<vmem>>, vector<32x32xbf16>
    %12 = arith.truncf %10 : vector<32x128xf32> to vector<32x128xbf16>
    %cst_6 = arith.constant dense<0.000000e+00> : vector<32x128xf32>
    %13 = tpu.matmul %11, %12, %cst_6 {dimension_numbers = #tpu.dot_dimension_numbers<[1], [0], [0], [1], [0, 0, 1, 1], [], []>} : vector<32x32xbf16>, vector<32x128xbf16>, vector<32x128xf32> -> vector<32x128xf32>
    %c0_7 = arith.constant 0 : index
    %c0_8 = arith.constant 0 : index
    %14 = vector.load %arg5[%c0_7, %c0_8] : memref<32x1xf32, #tpu.memory_space<vmem>>, vector<32x1xf32>
    %15 = vector.broadcast %14 : vector<32x1xf32> to vector<32x128xf32>
    %16 = arith.addf %13, %15 : vector<32x128xf32>
    %17 = math.tanh %16 : vector<32x128xf32>
    %c0_9 = arith.constant 0 : index
    %c0_10 = arith.constant 0 : index
    %18 = vector.load %arg6[%c0_9, %c0_10] : memref<16x32xbf16, #tpu.memory_space<vmem>>, vector<16x32xbf16>
    %19 = arith.truncf %17 : vector<32x128xf32> to vector<32x128xbf16>
    %cst_11 = arith.constant dense<0.000000e+00> : vector<16x128xf32>
    %20 = tpu.matmul %18, %19, %cst_11 {dimension_numbers = #tpu.dot_dimension_numbers<[1], [0], [0], [1], [0, 0, 1, 1], [], []>} : vector<16x32xbf16>, vector<32x128xbf16>, vector<16x128xf32> -> vector<16x128xf32>
    %c0_12 = arith.constant 0 : index
    %c0_13 = arith.constant 0 : index
    %21 = vector.load %arg7[%c0_12, %c0_13] : memref<16x1xf32, #tpu.memory_space<vmem>>, vector<16x1xf32>
    %22 = vector.broadcast %21 : vector<16x1xf32> to vector<16x128xf32>
    %23 = arith.addf %20, %22 : vector<16x128xf32>
    %24 = math.tanh %23 : vector<16x128xf32>
    %c0_14 = arith.constant 0 : index
    %c0_15 = arith.constant 0 : index
    %25 = vector.load %arg8[%c0_14, %c0_15] : memref<16x16xbf16, #tpu.memory_space<vmem>>, vector<16x16xbf16>
    %26 = arith.truncf %24 : vector<16x128xf32> to vector<16x128xbf16>
    %cst_16 = arith.constant dense<0.000000e+00> : vector<16x128xf32>
    %27 = tpu.matmul %25, %26, %cst_16 {dimension_numbers = #tpu.dot_dimension_numbers<[1], [0], [0], [1], [0, 0, 1, 1], [], []>} : vector<16x16xbf16>, vector<16x128xbf16>, vector<16x128xf32> -> vector<16x128xf32>
    %c0_17 = arith.constant 0 : index
    %c0_18 = arith.constant 0 : index
    %28 = vector.load %arg9[%c0_17, %c0_18] : memref<16x1xf32, #tpu.memory_space<vmem>>, vector<16x1xf32>
    %29 = vector.broadcast %28 : vector<16x1xf32> to vector<16x128xf32>
    %30 = arith.addf %27, %29 : vector<16x128xf32>
    %31 = math.tanh %30 : vector<16x128xf32>
    %c0_19 = arith.constant 0 : index
    %c0_20 = arith.constant 0 : index
    %32 = vector.load %arg10[%c0_19, %c0_20] : memref<1x16xbf16, #tpu.memory_space<vmem>>, vector<1x16xbf16>
    %33 = arith.truncf %31 : vector<16x128xf32> to vector<16x128xbf16>
    %cst_21 = arith.constant dense<0.000000e+00> : vector<1x128xf32>
    %34 = tpu.matmul %32, %33, %cst_21 {dimension_numbers = #tpu.dot_dimension_numbers<[1], [0], [0], [1], [0, 0, 1, 1], [], []>} : vector<1x16xbf16>, vector<16x128xbf16>, vector<1x128xf32> -> vector<1x128xf32>
    %c0_22 = arith.constant 0 : index
    %c0_23 = arith.constant 0 : index
    %35 = vector.load %arg11[%c0_22, %c0_23] : memref<1x1xf32, #tpu.memory_space<vmem>>, vector<1x1xf32>
    %36 = vector.broadcast %35 : vector<1x1xf32> to vector<1x128xf32>
    %37 = arith.addf %34, %36 : vector<1x128xf32>
    %38 = math.tanh %37 : vector<1x128xf32>
    %cst_24 = arith.constant 5.000000e-01 : f32
    %39 = vector.broadcast %cst_24 : f32 to vector<1x128xf32>
    %40 = arith.mulf %39, %38 : vector<1x128xf32>
    %cst_25 = arith.constant 5.000000e-01 : f32
    %41 = vector.broadcast %cst_25 : f32 to vector<1x128xf32>
    %42 = arith.addf %40, %41 : vector<1x128xf32>
    %c0_26 = arith.constant 0 : index
    %43 = arith.index_cast %1 : i32 to index
    %44 = vector.load %arg12[%c0_26, %43] : memref<1x128xf32, #tpu.memory_space<vmem>>, vector<1x128xf32>
    tpu.vector_store %arg12[%c0_26, %43], %42 {strides = array<i32>} : memref<1x128xf32, #tpu.memory_space<vmem>>, vector<1x128xf32>,
    %c1_i32 = arith.constant 1 : i32
    return
  }
  func.func @transform_0(%arg0: i32) -> (i32, i32) {
    %c0_i32 = arith.constant 0 : i32
    %c0_i32_0 = arith.constant 0 : i32
    return %arg0, %c0_i32 : i32, i32
  }
  func.func @transform_1(%arg0: i32) -> (i32, i32) {
    %c0_i32 = arith.constant 0 : i32
    %c0_i32_0 = arith.constant 0 : i32
    %c0_i32_1 = arith.constant 0 : i32
    return %c0_i32, %c0_i32_0 : i32, i32
  }
  func.func @transform_2(%arg0: i32) -> (i32, i32) {
    %c0_i32 = arith.constant 0 : i32
    %c0_i32_0 = arith.constant 0 : i32
    %c0_i32_1 = arith.constant 0 : i32
    return %c0_i32, %c0_i32_0 : i32, i32
  }
  func.func @transform_3(%arg0: i32) -> (i32, i32) {
    %c0_i32 = arith.constant 0 : i32
    %c0_i32_0 = arith.constant 0 : i32
    %c0_i32_1 = arith.constant 0 : i32
    return %c0_i32, %c0_i32_0 : i32, i32
  }
  func.func @transform_4(%arg0: i32) -> (i32, i32) {
    %c0_i32 = arith.constant 0 : i32
    %c0_i32_0 = arith.constant 0 : i32
    %c0_i32_1 = arith.constant 0 : i32
    return %c0_i32, %c0_i32_0 : i32, i32
  }
  func.func @transform_5(%arg0: i32) -> (i32, i32) {
    %c0_i32 = arith.constant 0 : i32
    %c0_i32_0 = arith.constant 0 : i32
    %c0_i32_1 = arith.constant 0 : i32
    return %c0_i32, %c0_i32_0 : i32, i32
  }
  func.func @transform_6(%arg0: i32) -> (i32, i32) {
    %c0_i32 = arith.constant 0 : i32
    %c0_i32_0 = arith.constant 0 : i32
    %c0_i32_1 = arith.constant 0 : i32
    return %c0_i32, %c0_i32_0 : i32, i32
  }
  func.func @transform_7(%arg0: i32) -> (i32, i32) {
    %c0_i32 = arith.constant 0 : i32
    %c0_i32_0 = arith.constant 0 : i32
    %c0_i32_1 = arith.constant 0 : i32
    return %c0_i32, %c0_i32_0 : i32, i32
  }
  func.func @transform_8(%arg0: i32) -> (i32, i32) {
    %c0_i32 = arith.constant 0 : i32
    %c0_i32_0 = arith.constant 0 : i32
    %c0_i32_1 = arith.constant 0 : i32
    return %c0_i32, %c0_i32_0 : i32, i32
  }
  func.func @transform_9(%arg0: i32) -> (i32, i32) {
    %c0_i32 = arith.constant 0 : i32
    %c0_i32_0 = arith.constant 0 : i32
    %c0_i32_1 = arith.constant 0 : i32
    return %c0_i32, %c0_i32_0 : i32, i32
  }
  func.func @transform_10(%arg0: i32) -> (i32, i32) {
    %c0_i32 = arith.constant 0 : i32
    %c0_i32_0 = arith.constant 0 : i32
    %c0_i32_1 = arith.constant 0 : i32
    return %c0_i32, %c0_i32_0 : i32, i32
  }
  func.func @transform_11(%arg0: i32) -> (i32, i32) {
    %c0_i32 = arith.constant 0 : i32
    %c0_i32_0 = arith.constant 0 : i32
    return %c0_i32, %arg0 : i32, i32
  }
}

</mosaic_0001>

<llo_original>
// kernel: net_forward.1
$region0: #{net_forward.1}
  #allocation0 [shape = 'u32[]', space=smem, size = 0x4, offset = 0x4, fixed_abs, tag = 'smem constant byte address 0x4 - core index']
  #allocation1 [shape = 'u32[144,128]{1,0:T(1,128)}', space=vmem, size = 0x12000, scoped, tag = 'internal scratch']
  #allocation2 [shape = 'f32[1,1]{1,0:T(1,128)S(1)}', space=vmem, size = 0x200, scoped, tag = 'scoped memory for net_forward.1']
  %s0 = inlined_call_operand.vmem [shape: f32[8,32], index: 0, kind: input, shape index: {}]
  %s1 = inlined_call_operand.vmem [shape: bf16[32,32], index: 1, kind: input, shape index: {}]
  %s2 = inlined_call_operand.vmem [shape: f32[32,1], index: 2, kind: input, shape index: {}]
  %s3 = inlined_call_operand.vmem [shape: bf16[32,32], index: 3, kind: input, shape index: {}]
  %s4 = inlined_call_operand.vmem [shape: f32[32,1], index: 4, kind: input, shape index: {}]
  %s5 = inlined_call_operand.vmem [shape: bf16[16,32], index: 5, kind: input, shape index: {}]
  %s6 = inlined_call_operand.vmem [shape: f32[16,1], index: 6, kind: input, shape index: {}]
  %s7 = inlined_call_operand.vmem [shape: bf16[16,16], index: 7, kind: input, shape index: {}]
  %s8 = inlined_call_operand.vmem [shape: f32[16,1], index: 8, kind: input, shape index: {}]
  %s9 = inlined_call_operand.vmem [shape: bf16[1,16], index: 9, kind: input, shape index: {}]
  %s10 = inlined_call_operand.<no memory space> [shape: f32[1,1], index: 10, kind: input, shape index: {}]
  %s11 = inlined_call_operand.vmem [shape: f32[1,128], index: 11, kind: output, shape index: {}]
  %s12 = sld [smem:[#allocation0]]
  $region54: #{net_forward.1} parent=0
    _
  %s14 = ssub.s32 1, %s12
  %s15 = scalar_select 0, %s14, %s12
  %v16 = vstv %s10
  %17 = vst [vmem:[#allocation2] sm:$0x1] %v16
  // Predicated region
  $region2: #{net_forward.1} parent=0 // pred_check
    _
  $region3: #{net_forward.1} parent=0 // pred_check_branch
    %19 = sbr.rel (0) target = $region5
  $region4: #{net_forward.1} parent=0 // pred_region
    _
  $region5: #{net_forward.1} parent=0 // pred_fallthru
    _
  // Predicated region
  $region6: #{net_forward.1} parent=0 // pred_check
    _
  $region7: #{net_forward.1} parent=0 // pred_check_branch
    %21 = sbr.rel (0) target = $region9
  $region8: #{net_forward.1} parent=0 // pred_region
    _
  $region9: #{net_forward.1} parent=0 // pred_fallthru
    _
  // Predicated region
  $region10: #{net_forward.1} parent=0 // pred_check
    _
  $region11: #{net_forward.1} parent=0 // pred_check_branch
    %23 = sbr.rel (0) target = $region13
  $region12: #{net_forward.1} parent=0 // pred_region
    _
  $region13: #{net_forward.1} parent=0 // pred_fallthru
    _
  // Predicated region
  $region14: #{net_forward.1} parent=0 // pred_check
    _
  $region15: #{net_forward.1} parent=0 // pred_check_branch
    %25 = sbr.rel (0) target = $region17
  $region16: #{net_forward.1} parent=0 // pred_region
    _
  $region17: #{net_forward.1} parent=0 // pred_fallthru
    _
  // Predicated region
  $region18: #{net_forward.1} parent=0 // pred_check
    _
  $region19: #{net_forward.1} parent=0 // pred_check_branch
    %27 = sbr.rel (0) target = $region21
  $region20: #{net_forward.1} parent=0 // pred_region
    _
  $region21: #{net_forward.1} parent=0 // pred_fallthru
    _
  // Predicated region
  $region22: #{net_forward.1} parent=0 // pred_check
    _
  $region23: #{net_forward.1} parent=0 // pred_check_branch
    %29 = sbr.rel (0) target = $region25
  $region24: #{net_forward.1} parent=0 // pred_region
    _
  $region25: #{net_forward.1} parent=0 // pred_fallthru
    _
  // Predicated region
  $region26: #{net_forward.1} parent=0 // pred_check
    _
  $region27: #{net_forward.1} parent=0 // pred_check_branch
    %31 = sbr.rel (0) target = $region29
  $region28: #{net_forward.1} parent=0 // pred_region
    _
  $region29: #{net_forward.1} parent=0 // pred_fallthru
    _
  // Predicated region
  $region30: #{net_forward.1} parent=0 // pred_check
    _
  $region31: #{net_forward.1} parent=0 // pred_check_branch
    %33 = sbr.rel (0) target = $region33
  $region32: #{net_forward.1} parent=0 // pred_region
    _
  $region33: #{net_forward.1} parent=0 // pred_fallthru
    _
  // Predicated region
  $region34: #{net_forward.1} parent=0 // pred_check
    _
  $region35: #{net_forward.1} parent=0 // pred_check_branch
    %35 = sbr.rel (0) target = $region37
  $region36: #{net_forward.1} parent=0 // pred_region
    _
  $region37: #{net_forward.1} parent=0 // pred_fallthru
    _
  // Predicated region
  $region38: #{net_forward.1} parent=0 // pred_check
    _
  $region39: #{net_forward.1} parent=0 // pred_check_branch
    %37 = sbr.rel (0) target = $region41
  $region40: #{net_forward.1} parent=0 // pred_region
    _
  $region41: #{net_forward.1} parent=0 // pred_fallthru
    _
  // Predicated region
  $region42: #{net_forward.1} parent=0 // pred_check
    _
  $region43: #{net_forward.1} parent=0 // pred_check_branch
    %39 = sbr.rel (0) target = $region45
  $region44: #{net_forward.1} parent=0 // pred_region
    _
  $region45: #{net_forward.1} parent=0 // pred_fallthru
    _
  %v41 = vld [vmem:[%s0] sm:$0xff]
  %v42 = vld [vmem:[%s0 + $0x8] sm:$0xff]
  %v43 = vld [vmem:[%s0 + $0x10] sm:$0xff]
  %v44 = vld [vmem:[%s0 + $0x18] sm:$0xff]
  %v45 = vld [vmem:[%s0 + $0x20] sm:$0xff]
  %v46 = vld [vmem:[%s0 + $0x28] sm:$0xff]
  %v47 = vld [vmem:[%s0 + $0x30] sm:$0xff]
  %v48 = vld [vmem:[%s0 + $0x38] sm:$0xff]
  %v49 = vld [vmem:[%s0 + $0x40] sm:$0xff]
  %v50 = vld [vmem:[%s0 + $0x48] sm:$0xff]
  %v51 = vld [vmem:[%s0 + $0x50] sm:$0xff]
  %v52 = vld [vmem:[%s0 + $0x58] sm:$0xff]
  %v53 = vld [vmem:[%s0 + $0x60] sm:$0xff]
  %v54 = vld [vmem:[%s0 + $0x68] sm:$0xff]
  %v55 = vld [vmem:[%s0 + $0x70] sm:$0xff]
  %v56 = vld [vmem:[%s0 + $0x78] sm:$0xff]
  %v57 = vpack.c.bf16 %v42, %v41
  %v58 = vpack.c.bf16 %v44, %v43
  %v59 = vpack.c.bf16 %v46, %v45
  %v60 = vpack.c.bf16 %v48, %v47
  %v61 = vpack.c.bf16 %v50, %v49
  %v62 = vpack.c.bf16 %v52, %v51
  %v63 = vpack.c.bf16 %v54, %v53
  %v64 = vpack.c.bf16 %v56, %v55
  %v65 = vld [vmem:[%s1] sm:$0xf]
  %v66 = vld [vmem:[%s1 + $0x4] sm:$0xf]
  %v67 = vld [vmem:[%s1 + $0x8] sm:$0xf]
  %v68 = vld [vmem:[%s1 + $0xc] sm:$0xf]
  %v69 = vld [vmem:[%s2] sm:$0xff]
  %v70 = vld [vmem:[%s2 + $0x8] sm:$0xff]
  %v71 = vld [vmem:[%s2 + $0x10] sm:$0xff]
  %v72 = vld [vmem:[%s2 + $0x18] sm:$0xff]
  %74 = vset.pattern.permute.xlu0 0
  %75 = vperm.xlu0 %74, %v69
  %v76 = vpop.permute.xlu0 %75
  %79 = vset.pattern.permute.xlu0 0
  %80 = vperm.xlu0 %79, %v70
  %v81 = vpop.permute.xlu0 %80
  %84 = vset.pattern.permute.xlu0 0
  %85 = vperm.xlu0 %84, %v71
  %v86 = vpop.permute.xlu0 %85
  %89 = vset.pattern.permute.xlu0 0
  %90 = vperm.xlu0 %89, %v72
  %v91 = vpop.permute.xlu0 %90
  %v97 = vunpack.c.l.b16 %v65
  %v98 = vunpack.c.l.b16 %v66
  %v99 = vunpack.c.l.b16 %v67
  %v100 = vunpack.c.l.b16 %v68
  %v101 = vpack.c.b16 %v98, %v97
  %v102 = vpack.c.b16 %v100, %v99
  %vm103 = vcmask 261120
  %v105 = vsel %vm103, %v101, 0
  %v108 = vsel %vm103, %v102, 0
  %v111 = vsel %vm103, %v57, 0
  %v114 = vsel %vm103, %v58, 0
  %v117 = vsel %vm103, %v59, 0
  %v120 = vsel %vm103, %v60, 0
  %v123 = vsel %vm103, %v61, 0
  %v126 = vsel %vm103, %v62, 0
  %v129 = vsel %vm103, %v63, 0
  %v132 = vsel %vm103, %v64, 0
  %134 = vmatprep.subr.bf16.mxu0 0
  %135 = vmatpush1.bf16.xpose.msra.mxu0 %v111
  %136 = vmatprep.subr.bf16.mxu0 0
  %137 = vmatpush1.bf16.xpose.msra.mxu0 %v114
  %138 = vmatprep.subr.bf16.mxu0 0
  %139 = vmatpush1.bf16.xpose.msra.mxu0 %v117
  %140 = vmatprep.subr.bf16.mxu0 0
  %141 = vmatpush1.bf16.xpose.msra.mxu0 %v120
  %142 = vmatprep.subr.bf16.mxu0 0
  %143 = vmatpush1.bf16.xpose.msra.mxu0 %v123
  %144 = vmatprep.subr.bf16.mxu0 0
  %145 = vmatpush1.bf16.xpose.msra.mxu0 %v126
  %146 = vmatprep.subr.bf16.mxu0 0
  %147 = vmatpush1.bf16.xpose.msra.mxu0 %v129
  %148 = vmatprep.subr.bf16.mxu0 0
  %149 = vmatpush1.bf16.xpose.msra.mxu0 %v132
  %150 = vmatprep.subr.bf16.mxu0 0
  %151 = vmatpush1.bf16.xpose.msra.mxu0 0
  %152 = vmatprep.subr.bf16.mxu0 0
  %153 = vmatpush1.bf16.xpose.msra.mxu0 0
  %154 = vmatprep.subr.bf16.mxu0 0
  %155 = vmatpush1.bf16.xpose.msra.mxu0 0
  %156 = vmatprep.subr.bf16.mxu0 0
  %157 = vmatpush1.bf16.xpose.msra.mxu0 0
  %158 = vmatprep.subr.bf16.mxu0 0
  %159 = vmatpush1.bf16.xpose.msra.mxu0 0
  %160 = vmatprep.subr.bf16.mxu0 0
  %161 = vmatpush1.bf16.xpose.msra.mxu0 0
  %162 = vmatprep.subr.bf16.mxu0 0
  %163 = vmatpush1.bf16.xpose.msra.mxu0 0
  %164 = vmatprep.subr.bf16.mxu0 0
  %165 = vmatpush1.bf16.xpose.msra.mxu0 0
  %166 = vmatprep.mubr.bf16.mxu0 0
  %167 = vmatmul.mubr.bf16.gmra.mrb[0].mxu0 %v105
  %v168 = vpop.f32.mrb[0].mxu0
  %v169 = vadd.f32 %v76, %v168
  %v170 = vpop.f32.mrb[0].mxu0
  %v171 = vpop.f32.mrb[0].mxu0
  %v172 = vadd.f32 %v81, %v171
  %v173 = vpop.f32.mrb[0].mxu0
  %174 = vmatprep.mubr.bf16.mxu0 0
  %175 = vmatmul.mubr.bf16.gmra.mrb[0].mxu0 %v108
  %v176 = vpop.f32.mrb[0].mxu0
  %v177 = vadd.f32 %v86, %v176
  %v178 = vpop.f32.mrb[0].mxu0
  %v179 = vpop.f32.mrb[0].mxu0
  %v180 = vadd.f32 %v91, %v179
  %v181 = vpop.f32.mrb[0].mxu0
  %182 = vdwg.mxu0
  %v183 = vtanh.pop %v169
  %v184 = vtanh.pop %v172
  %v185 = vtanh.pop %v177
  %v186 = vtanh.pop %v180
  %v187 = vld [vmem:[%s3] sm:$0xf]
  %v188 = vld [vmem:[%s3 + $0x4] sm:$0xf]
  %v189 = vld [vmem:[%s3 + $0x8] sm:$0xf]
  %v190 = vld [vmem:[%s3 + $0xc] sm:$0xf]
  %v191 = vpack.c.bf16 %v184, %v183
  %v192 = vpack.c.bf16 %v186, %v185
  %v193 = vld [vmem:[%s4] sm:$0xff]
  %v194 = vld [vmem:[%s4 + $0x8] sm:$0xff]
  %v195 = vld [vmem:[%s4 + $0x10] sm:$0xff]
  %v196 = vld [vmem:[%s4 + $0x18] sm:$0xff]
  %198 = vset.pattern.permute.xlu0 0
  %199 = vperm.xlu0 %198, %v193
  %v200 = vpop.permute.xlu0 %199
  %203 = vset.pattern.permute.xlu0 0
  %204 = vperm.xlu0 %203, %v194
  %v205 = vpop.permute.xlu0 %204
  %208 = vset.pattern.permute.xlu0 0
  %209 = vperm.xlu0 %208, %v195
  %v210 = vpop.permute.xlu0 %209
  %213 = vset.pattern.permute.xlu0 0
  %214 = vperm.xlu0 %213, %v196
  %v215 = vpop.permute.xlu0 %214
  %v221 = vunpack.c.l.b16 %v187
  %v222 = vunpack.c.l.b16 %v188
  %v223 = vunpack.c.l.b16 %v189
  %v224 = vunpack.c.l.b16 %v190
  %v225 = vpack.c.b16 %v222, %v221
  %v226 = vpack.c.b16 %v224, %v223
  %v228 = vsel %vm103, %v225, 0
  %v231 = vsel %vm103, %v226, 0
  %233 = vmatprep.subr.bf16.mxu0 0
  %234 = vmatpush1.bf16.msra.mxu0 %v191
  %235 = vmatprep.subr.bf16.mxu0 0
  %236 = vmatpush1.bf16.msra.mxu0 %v192
  %237 = vmatprep.subr.bf16.mxu0 0
  %238 = vmatpush1.bf16.msra.mxu0 0
  %239 = vmatprep.subr.bf16.mxu0 0
  %240 = vmatpush1.bf16.msra.mxu0 0
  %241 = vmatprep.subr.bf16.mxu0 0
  %242 = vmatpush1.bf16.msra.mxu0 0
  %243 = vmatprep.subr.bf16.mxu0 0
  %244 = vmatpush1.bf16.msra.mxu0 0
  %245 = vmatprep.subr.bf16.mxu0 0
  %246 = vmatpush1.bf16.msra.mxu0 0
  %247 = vmatprep.subr.bf16.mxu0 0
  %248 = vmatpush1.bf16.msra.mxu0 0
  %249 = vmatprep.subr.bf16.mxu0 0
  %250 = vmatpush1.bf16.msra.mxu0 0
  %251 = vmatprep.subr.bf16.mxu0 0
  %252 = vmatpush1.bf16.msra.mxu0 0
  %253 = vmatprep.subr.bf16.mxu0 0
  %254 = vmatpush1.bf16.msra.mxu0 0
  %255 = vmatprep.subr.bf16.mxu0 0
  %256 = vmatpush1.bf16.msra.mxu0 0
  %257 = vmatprep.subr.bf16.mxu0 0
  %258 = vmatpush1.bf16.msra.mxu0 0
  %259 = vmatprep.subr.bf16.mxu0 0
  %260 = vmatpush1.bf16.msra.mxu0 0
  %261 = vmatprep.subr.bf16.mxu0 0
  %262 = vmatpush1.bf16.msra.mxu0 0
  %263 = vmatprep.subr.bf16.mxu0 0
  %264 = vmatpush1.bf16.msra.mxu0 0
  %265 = vmatprep.mubr.bf16.mxu0 0
  %266 = vmatmul.mubr.bf16.gmra.mrb[0].mxu0 %v228
  %v267 = vpop.f32.mrb[0].mxu0
  %v268 = vadd.f32 %v200, %v267
  %v269 = vpop.f32.mrb[0].mxu0
  %v270 = vpop.f32.mrb[0].mxu0
  %v271 = vadd.f32 %v205, %v270
  %v272 = vpop.f32.mrb[0].mxu0
  %273 = vmatprep.mubr.bf16.mxu0 0
  %274 = vmatmul.mubr.bf16.gmra.mrb[0].mxu0 %v231
  %v275 = vpop.f32.mrb[0].mxu0
  %v276 = vadd.f32 %v210, %v275
  %v277 = vpop.f32.mrb[0].mxu0
  %v278 = vpop.f32.mrb[0].mxu0
  %v279 = vadd.f32 %v215, %v278
  %v280 = vpop.f32.mrb[0].mxu0
  %281 = vdwg.mxu0
  %v282 = vtanh.pop %v268
  %v283 = vtanh.pop %v271
  %v284 = vtanh.pop %v276
  %v285 = vtanh.pop %v279
  %v286 = vld [vmem:[%s5] sm:$0xf]
  %v287 = vld [vmem:[%s5 + $0x4] sm:$0xf]
  %v288 = vpack.c.bf16 %v283, %v282
  %v289 = vpack.c.bf16 %v285, %v284
  %v290 = vld [vmem:[%s6] sm:$0xff]
  %v291 = vld [vmem:[%s6 + $0x8] sm:$0xff]
  %293 = vset.pattern.permute.xlu0 0
  %294 = vperm.xlu0 %293, %v290
  %v295 = vpop.permute.xlu0 %294
  %298 = vset.pattern.permute.xlu0 0
  %299 = vperm.xlu0 %298, %v291
  %v300 = vpop.permute.xlu0 %299
  %v304 = vunpack.c.l.b16 %v286
  %v305 = vunpack.c.l.b16 %v287
  %v306 = vpack.c.b16 %v305, %v304
  %v308 = vsel %vm103, %v306, 0
  %310 = vmatprep.subr.bf16.mxu0 0
  %311 = vmatpush1.bf16.msra.mxu0 %v288
  %312 = vmatprep.subr.bf16.mxu0 0
  %313 = vmatpush1.bf16.msra.mxu0 %v289
  %314 = vmatprep.subr.bf16.mxu0 0
  %315 = vmatpush1.bf16.msra.mxu0 0
  %316 = vmatprep.subr.bf16.mxu0 0
  %317 = vmatpush1.bf16.msra.mxu0 0
  %318 = vmatprep.subr.bf16.mxu0 0
  %319 = vmatpush1.bf16.msra.mxu0 0
  %320 = vmatprep.subr.bf16.mxu0 0
  %321 = vmatpush1.bf16.msra.mxu0 0
  %322 = vmatprep.subr.bf16.mxu0 0
  %323 = vmatpush1.bf16.msra.mxu0 0
  %324 = vmatprep.subr.bf16.mxu0 0
  %325 = vmatpush1.bf16.msra.mxu0 0
  %326 = vmatprep.subr.bf16.mxu0 0
  %327 = vmatpush1.bf16.msra.mxu0 0
  %328 = vmatprep.subr.bf16.mxu0 0
  %329 = vmatpush1.bf16.msra.mxu0 0
  %330 = vmatprep.subr.bf16.mxu0 0
  %331 = vmatpush1.bf16.msra.mxu0 0
  %332 = vmatprep.subr.bf16.mxu0 0
  %333 = vmatpush1.bf16.msra.mxu0 0
  %334 = vmatprep.subr.bf16.mxu0 0
  %335 = vmatpush1.bf16.msra.mxu0 0
  %336 = vmatprep.subr.bf16.mxu0 0
  %337 = vmatpush1.bf16.msra.mxu0 0
  %338 = vmatprep.subr.bf16.mxu0 0
  %339 = vmatpush1.bf16.msra.mxu0 0
  %340 = vmatprep.subr.bf16.mxu0 0
  %341 = vmatpush1.bf16.msra.mxu0 0
  %342 = vmatprep.mubr.bf16.mxu0 0
  %343 = vmatmul.mubr.bf16.gmra.mrb[0].mxu0 %v308
  %v344 = vpop.f32.mrb[0].mxu0
  %v345 = vadd.f32 %v295, %v344
  %v346 = vpop.f32.mrb[0].mxu0
  %v347 = vpop.f32.mrb[0].mxu0
  %v348 = vadd.f32 %v300, %v347
  %v349 = vpop.f32.mrb[0].mxu0
  %350 = vdwg.mxu0
  %v351 = vtanh.pop %v345
  %v352 = vtanh.pop %v348
  %v353 = vld [vmem:[%s7] sm:$0xf]
  %v354 = vld [vmem:[%s7 + $0x4] sm:$0xf]
  %v355 = vpack.c.bf16 %v352, %v351
  %v356 = vld [vmem:[%s8] sm:$0xff]
  %v357 = vld [vmem:[%s8 + $0x8] sm:$0xff]
  %359 = vset.pattern.permute.xlu0 0
  %360 = vperm.xlu0 %359, %v356
  %v361 = vpop.permute.xlu0 %360
  %364 = vset.pattern.permute.xlu0 0
  %365 = vperm.xlu0 %364, %v357
  %v366 = vpop.permute.xlu0 %365
  %v370 = vunpack.c.l.b16 %v353
  %v371 = vunpack.c.l.b16 %v354
  %v372 = vpack.c.b16 %v371, %v370
  %vm373 = vcmask 130048
  %v375 = vsel %vm373, %v372, 0
  %377 = vmatprep.subr.bf16.mxu0 0
  %378 = vmatpush1.bf16.msra.mxu0 %v355
  %379 = vmatprep.subr.bf16.mxu0 0
  %380 = vmatpush1.bf16.msra.mxu0 0
  %381 = vmatprep.subr.bf16.mxu0 0
  %382 = vmatpush1.bf16.msra.mxu0 0
  %383 = vmatprep.subr.bf16.mxu0 0
  %384 = vmatpush1.bf16.msra.mxu0 0
  %385 = vmatprep.subr.bf16.mxu0 0
  %386 = vmatpush1.bf16.msra.mxu0 0
  %387 = vmatprep.subr.bf16.mxu0 0
  %388 = vmatpush1.bf16.msra.mxu0 0
  %389 = vmatprep.subr.bf16.mxu0 0
  %390 = vmatpush1.bf16.msra.mxu0 0
  %391 = vmatprep.subr.bf16.mxu0 0
  %392 = vmatpush1.bf16.msra.mxu0 0
  %393 = vmatprep.subr.bf16.mxu0 0
  %394 = vmatpush1.bf16.msra.mxu0 0
  %395 = vmatprep.subr.bf16.mxu0 0
  %396 = vmatpush1.bf16.msra.mxu0 0
  %397 = vmatprep.subr.bf16.mxu0 0
  %398 = vmatpush1.bf16.msra.mxu0 0
  %399 = vmatprep.subr.bf16.mxu0 0
  %400 = vmatpush1.bf16.msra.mxu0 0
  %401 = vmatprep.subr.bf16.mxu0 0
  %402 = vmatpush1.bf16.msra.mxu0 0
  %403 = vmatprep.subr.bf16.mxu0 0
  %404 = vmatpush1.bf16.msra.mxu0 0
  %405 = vmatprep.subr.bf16.mxu0 0
  %406 = vmatpush1.bf16.msra.mxu0 0
  %407 = vmatprep.subr.bf16.mxu0 0
  %408 = vmatpush1.bf16.msra.mxu0 0
  %409 = vmatprep.mubr.bf16.mxu0 0
  %410 = vmatmul.mubr.bf16.gmra.mrb[0].mxu0 %v375
  %v411 = vpop.f32.mrb[0].mxu0
  %v412 = vadd.f32 %v361, %v411
  %v413 = vpop.f32.mrb[0].mxu0
  %v414 = vpop.f32.mrb[0].mxu0
  %v415 = vadd.f32 %v366, %v414
  %v416 = vpop.f32.mrb[0].mxu0
  %417 = vdwg.mxu0
  %v418 = vtanh.pop %v412
  %v419 = vtanh.pop %v415
  %v420 = vld [vmem:[%s9] sm:$0x1]
  %v421 = vpack.c.bf16 %v419, %v418
  %v422 = vld [vmem:[#allocation2] sm:$0x1]
  %424 = vset.pattern.permute.xlu0 0
  %425 = vperm.xlu0 %424, %v422
  %v426 = vpop.permute.xlu0 %425
  %v428 = vlaneseq
  %v429 = vshrl.u32 %v428, 7
  %v430 = vsub.s32 0, %v429
  %v431 = vrot.slane %v426, %v430
  %v433 = vsel %vm373, %v420, 0
  %435 = vmatprep.subr.bf16.mxu0 0
  %436 = vmatpush1.bf16.msra.mxu0 %v421
  %437 = vmatprep.subr.bf16.mxu0 0
  %438 = vmatpush1.bf16.msra.mxu0 0
  %439 = vmatprep.subr.bf16.mxu0 0
  %440 = vmatpush1.bf16.msra.mxu0 0
  %441 = vmatprep.subr.bf16.mxu0 0
  %442 = vmatpush1.bf16.msra.mxu0 0
  %443 = vmatprep.subr.bf16.mxu0 0
  %444 = vmatpush1.bf16.msra.mxu0 0
  %445 = vmatprep.subr.bf16.mxu0 0
  %446 = vmatpush1.bf16.msra.mxu0 0
  %447 = vmatprep.subr.bf16.mxu0 0
  %448 = vmatpush1.bf16.msra.mxu0 0
  %449 = vmatprep.subr.bf16.mxu0 0
  %450 = vmatpush1.bf16.msra.mxu0 0
  %451 = vmatprep.subr.bf16.mxu0 0
  %452 = vmatpush1.bf16.msra.mxu0 0
  %453 = vmatprep.subr.bf16.mxu0 0
  %454 = vmatpush1.bf16.msra.mxu0 0
  %455 = vmatprep.subr.bf16.mxu0 0
  %456 = vmatpush1.bf16.msra.mxu0 0
  %457 = vmatprep.subr.bf16.mxu0 0
  %458 = vmatpush1.bf16.msra.mxu0 0
  %459 = vmatprep.subr.bf16.mxu0 0
  %460 = vmatpush1.bf16.msra.mxu0 0
  %461 = vmatprep.subr.bf16.mxu0 0
  %462 = vmatpush1.bf16.msra.mxu0 0
  %463 = vmatprep.subr.bf16.mxu0 0
  %464 = vmatpush1.bf16.msra.mxu0 0
  %465 = vmatprep.subr.bf16.mxu0 0
  %466 = vmatpush1.bf16.msra.mxu0 0
  %467 = vmatprep.mubr.bf16.mxu0 0
  %468 = vmatmul.mubr.bf16.gmra.mrb[0].mxu0 %v433
  %v469 = vpop.f32.mrb[0].mxu0
  %v470 = vadd.f32 %v431, %v469
  %v471 = vpop.f32.mrb[0].mxu0
  %v472 = vpop.f32.mrb[0].mxu0
  %v473 = vpop.f32.mrb[0].mxu0
  %474 = vdwg.mxu0
  %v475 = vtanh.pop %v470
  %v476 = vmul.f32 %v475, 0.5
  %v477 = vadd.f32 %v476, 0.5
  %478 = vst [vmem:[%s11] sm:$0x1] %v477
  // Predicated region
  $region46: #{net_forward.1} parent=0 // pred_check
    _
  $region47: #{net_forward.1} parent=0 // pred_check_branch
    %480 = sbr.rel (0) target = $region49
  $region48: #{net_forward.1} parent=0 // pred_region
    _
  $region49: #{net_forward.1} parent=0 // pred_fallthru
    _
  // Predicated region
  $region50: #{net_forward.1} parent=0 // pred_check
    _
  $region51: #{net_forward.1} parent=0 // pred_check_branch
    %482 = sbr.rel (0) target = $region53
  $region52: #{net_forward.1} parent=0 // pred_region
    _
  $region53: #{net_forward.1} parent=0 // pred_fallthru
    _

</llo_original>
